<compile_context>
chip_gen: v6e
topology: v6e:2x2x1
jax: 0.10.0
libtpu: 0.0.40
codegen_flags: <defaults>
</compile_context>

<pallas_src>
import jax
import jax.numpy as jnp
from jax.experimental import pallas as pl
from jax.experimental.pallas import tpu as pltpu


def _mish_kernel(x_ref, o_ref):
    xf = x_ref[...].astype(jnp.float32)
    # Single-exp form of tanh(softplus(x)):
    #   tanh(softplus(x)) = n / (n + 2),  n = e^x * (e^x + 2)
    # exp is clamped at 20; for x >= ~18, n + 2 == n in f32, so the ratio is
    # exactly 1.0f and `xf * ratio` returns xf bit-exactly -- no where needed.
    e = jnp.exp(jnp.minimum(xf, 20.0))
    n = e * (e + 2.0)
    ratio = n / (n + 2.0)  # precise divide: keeps error at a few ULP vs reference
    o_ref[...] = (xf * ratio).astype(o_ref.dtype)


# Sublane packing per itemsize (rows per 32-bit sublane group).
_SUBLANE_PACK = {4: 8, 2: 16, 1: 32}


def _vmem_limit_bytes() -> int:
    """Generation-aware scoped-VMEM limit: ~3/4 of physical, capped at 64 MiB."""
    cap = None
    try:
        cap = getattr(pltpu.get_tpu_info(), "vmem_capacity_bytes", None)
    except Exception:
        cap = None
    if not cap:
        # Safe everywhere: 48 MiB fits v7x (64 MiB physical) with headroom.
        return 48 * 1024 * 1024
    return int(min(64 * 1024 * 1024, (int(cap) * 3) // 4))


def mish(x: jax.Array, *, target_block_bytes: int = 8 * 1024 * 1024) -> jax.Array:
    """Elementwise Mish via a Pallas TPU kernel. Works for any input shape."""
    orig_shape = x.shape
    orig_dtype = x.dtype
    total = int(x.size)
    if total == 0:
        return x

    x_flat = jnp.ravel(x)

    # Pick a lane-dense slab width (large multiple of 128) that divides the
    # flat length so the aligned common case needs no padding at all.
    width = 0
    for cand in (4096, 2048, 1024, 512, 256, 128):
        if total % cand == 0:
            width = cand
            break
    if width == 0:
        # Ragged (non-128-aligned) length: pad up to one 1024-element group.
        # TODO(synk): if ragged shapes occur in production, replace the pad
        # copy with an in-kernel masked tail store (scalar-prefetch `total`).
        width = 1024
        padded = pl.cdiv(total, width) * width
        x_flat = jnp.pad(x_flat, (0, padded - total))
    else:
        padded = total

    rows = padded // width
    itemsize = jnp.dtype(orig_dtype).itemsize
    pack = _SUBLANE_PACK.get(itemsize, 8)

    if rows <= pack:
        # Block equals the full row extent (allowed even if not (8,128)-aligned).
        block_rows = rows
    else:
        # ~target_block_bytes per tile; in + out each double-buffered means
        # 4 x tile live in VMEM (32 MiB at the 8 MiB default), well inside the
        # generation-aware scoped-VMEM limit below.
        block_rows = max(pack, min(rows, target_block_bytes // (width * itemsize)))
        # Keep at least 2 grid steps so a v7x megacore can shard the parallel
        # axis across both TensorCores.
        half_rows = max(pack, (pl.cdiv(rows, 2) // pack) * pack)
        block_rows = min(block_rows, half_rows)
        block_rows = max(pack, (block_rows // pack) * pack)  # sublane-packed

    grid = (pl.cdiv(rows, block_rows),)  # ragged last block handled by Pallas

    out2d = pl.pallas_call(
        _mish_kernel,
        out_shape=jax.ShapeDtypeStruct((rows, width), orig_dtype),
        grid_spec=pltpu.PrefetchScalarGridSpec(
            num_scalar_prefetch=0,
            grid=grid,
            in_specs=[pl.BlockSpec((block_rows, width), lambda i: (i, 0))],
            out_specs=pl.BlockSpec((block_rows, width), lambda i: (i, 0)),
        ),
        compiler_params=pltpu.CompilerParams(
            dimension_semantics=("parallel",),
            vmem_limit_bytes=_vmem_limit_bytes(),
        ),
        cost_estimate=pl.CostEstimate(
            flops=8 * padded,
            transcendentals=padded,
            bytes_accessed=2 * padded * itemsize,
        ),
    )(x_flat.reshape(rows, width))

    out_flat = out2d.reshape(-1)
    if padded != total:
        out_flat = out_flat[:total]
    return out_flat.reshape(orig_shape)


def _mish_ref(x):
    # pure-JAX reference for verification
    xf = x.astype(jnp.float32)
    return (xf * jnp.tanh(jax.nn.softplus(xf))).astype(x.dtype)


if __name__ == "__main__":
    key = jax.random.PRNGKey(0)

    # small NCHW input consistent with the module's "(N, *)" contract
    x = jax.random.normal(key, (2, 4, 16, 16), dtype=jnp.float32)
    y = jax.block_until_ready(mish(x))
    y_ref = _mish_ref(x)
    assert y.shape == x.shape and y.dtype == x.dtype
    assert jnp.allclose(y, y_ref, atol=1e-5, rtol=1e-5)

    # ragged (non-128-aligned) shape exercises the padded path
    x2 = 4.0 * jax.random.normal(jax.random.PRNGKey(1), (3, 5, 7), dtype=jnp.float32)
    y2 = jax.block_until_ready(mish(x2))
    y2_ref = _mish_ref(x2)
    assert y2.shape == x2.shape and y2.dtype == x2.dtype
    assert jnp.allclose(y2, y2_ref, atol=1e-5, rtol=1e-5)

    # medium aligned shape exercises the multi-block (>= 2 grid steps) path
    x3 = jax.random.normal(jax.random.PRNGKey(2), (4, 16, 32, 32), dtype=jnp.float32)
    y3 = jax.block_until_ready(mish(x3))
    y3_ref = _mish_ref(x3)
    assert y3.shape == x3.shape and y3.dtype == x3.dtype
    assert jnp.allclose(y3, y3_ref, atol=1e-5, rtol=1e-5)

    print("KERNEL_OK")
</pallas_src>

<mosaic_0001>
module attributes {stable_mosaic.version = 11 : i64} {
  func.func @_mish_kernel(%arg0: i32, %arg1: memref<1x2048xf32, #tpu.memory_space<vmem>>, %arg2: memref<1x2048xf32, #tpu.memory_space<vmem>>) attributes {dimension_semantics = [#tpu.dimension_semantics<parallel>], iteration_bounds = array<i64: 1>, scalar_prefetch = 0 : i64, scratch_operands = 0 : i64, tpu.core_type = #tpu.core_type<tc>, window_params = [{transform_indices = @transform_0, window_bounds = array<i64: 1, 2048>}, {transform_indices = @transform_1, window_bounds = array<i64: 1, 2048>}]} {
    %c0 = arith.constant 0 : index
    %c0_0 = arith.constant 0 : index
    %0 = vector.load %arg1[%c0, %c0_0] : memref<1x2048xf32, #tpu.memory_space<vmem>>, vector<1x2048xf32>
    %cst = arith.constant 2.000000e+01 : f32
    %1 = vector.broadcast %cst : f32 to vector<1x2048xf32>
    %2 = arith.minimumf %0, %1 : vector<1x2048xf32>
    %3 = math.exp %2 : vector<1x2048xf32>
    %cst_1 = arith.constant 2.000000e+00 : f32
    %4 = vector.broadcast %cst_1 : f32 to vector<1x2048xf32>
    %5 = arith.addf %3, %4 : vector<1x2048xf32>
    %6 = arith.mulf %3, %5 : vector<1x2048xf32>
    %cst_2 = arith.constant 2.000000e+00 : f32
    %7 = vector.broadcast %cst_2 : f32 to vector<1x2048xf32>
    %8 = arith.addf %6, %7 : vector<1x2048xf32>
    %9 = arith.divf %6, %8 : vector<1x2048xf32>
    %10 = arith.mulf %0, %9 : vector<1x2048xf32>
    %c0_3 = arith.constant 0 : index
    %c0_4 = arith.constant 0 : index
    %11 = vector.load %arg2[%c0_3, %c0_4] : memref<1x2048xf32, #tpu.memory_space<vmem>>, vector<1x2048xf32>
    tpu.vector_store %arg2[%c0_3, %c0_4], %10 {strides = array<i32>} : memref<1x2048xf32, #tpu.memory_space<vmem>>, vector<1x2048xf32>,
    return
  }
  func.func @transform_0(%arg0: i32) -> (i32, i32) {
    %c0_i32 = arith.constant 0 : i32
    %c0_i32_0 = arith.constant 0 : i32
    return %arg0, %c0_i32 : i32, i32
  }
  func.func @transform_1(%arg0: i32) -> (i32, i32) {
    %c0_i32 = arith.constant 0 : i32
    %c0_i32_0 = arith.constant 0 : i32
    return %arg0, %c0_i32 : i32, i32
  }
}

</mosaic_0001>

<llo_original>
// kernel: tpu_custom_call.1
$region0: #{tpu_custom_call.1}
  #allocation0 [shape = 'u32[]', space=smem, size = 0x4, offset = 0x4, fixed_abs, tag = 'smem constant byte address 0x4 - core index']
  #allocation1 [shape = 'u32[144,128]{1,0:T(1,128)}', space=vmem, size = 0x12000, scoped, tag = 'internal scratch']
  %s0 = inlined_call_operand.hbm [shape: f32[1,2048], index: 0, kind: input, shape index: {}]
  %s1 = inlined_call_operand.hbm [shape: f32[1,2048], index: 1, kind: output, shape index: {}]
  %s2 = sld [smem:[#allocation0]]
  $region18: #{tpu_custom_call.1} parent=0
    _
  %s4 = ssub.s32 1, %s2
  %s5 = scalar_select 0, %s4, %s2
  $region1: #{tpu_custom_call.1} parent=0
    #allocation2 [shape = 'u8[8192]{0}', space=vmem, size = 0x2000, scoped, tag = 'input window, operand 0, single buffered']
    #allocation3 [shape = 's32[1]{0}', space=sflag, size = 0x4, scoped, tag = 'scoped memory for tpu_custom_call.1']
    #allocation4 [shape = 's32[1]{0}', space=sflag, size = 0x4, scoped, tag = 'scoped memory for tpu_custom_call.1']
    #allocation5 [shape = 'u8[8192]{0}', space=vmem, size = 0x2000, scoped, tag = 'output window, operand 0, single buffered']
    %6 = vsyncpa [#allocation3], 0
    %7 = vsyncpa [#allocation4], 0
    // Predicated region
    $region2: #{tpu_custom_call.1} parent=1 // pred_check
      _
    $region3: #{tpu_custom_call.1} parent=1 // pred_check_branch
      %9 = sbr.rel (0) target = $region5
    $region4: #{tpu_custom_call.1} parent=1 // pred_region
      %s11 = ssub.s32 256, 256
      %12 = vsyncadd [#allocation3], %s11
      %s14 = sshll.u32 [#allocation2], 4
      %s15 = int_to_ptr.vmem [resolvable:$true] %s14
      %17 = dma.hbm_to_vmem [thread:$0]  %s0, 256, %s15, [#allocation3]
    $region5: #{tpu_custom_call.1} parent=1 // pred_fallthru
      _
    // Predicated region
    $region6: #{tpu_custom_call.1} parent=1 // pred_check
      _
    $region7: #{tpu_custom_call.1} parent=1 // pred_check_branch
      %19 = sbr.rel (0) target = $region9
    $region8: #{tpu_custom_call.1} parent=1 // pred_region
      %20 = dma.done [#allocation3], 256
    $region9: #{tpu_custom_call.1} parent=1 // pred_fallthru
      _
    %v21 = vld [vmem:[#allocation2] sm:$0xff]
    %v22 = vld [vmem:[#allocation2 + $0x8] sm:$0xff]
    %v23 = vmin.f32 %v21, 20.0
    %v24 = vmin.f32 %v22, 20.0
    %v25 = vmul.f32 %v23, 1.442695
    %v26 = vpow.pop %v25
    %v27 = vmul.f32 %v24, 1.442695
    %v28 = vpow.pop %v27
    %v29 = vadd.f32 %v26, 2.0
    %v30 = vadd.f32 %v28, 2.0
    %v31 = vmul.f32 %v26, %v29
    %v32 = vmul.f32 %v28, %v30
    %v33 = vadd.f32 %v31, 2.0
    %v34 = vadd.f32 %v32, 2.0
    %v35 = vrcp.pop %v33
    %v36 = vmul.f32 %v31, %v35
    %v37 = vrcp.pop %v34
    %v38 = vmul.f32 %v32, %v37
    %v39 = vmul.f32 %v21, %v36
    %v40 = vmul.f32 %v22, %v38
    %41 = vst [vmem:[#allocation5] sm:$0xff] %v39
    %42 = vst [vmem:[#allocation5 + $0x8] sm:$0xff] %v40
    // Predicated region
    $region10: #{tpu_custom_call.1} parent=1 // pred_check
      _
    $region11: #{tpu_custom_call.1} parent=1 // pred_check_branch
      %44 = sbr.rel (0) target = $region13
    $region12: #{tpu_custom_call.1} parent=1 // pred_region
      %s46 = ssub.s32 256, 256
      %47 = vsyncadd [#allocation4], %s46
      %s49 = sshll.u32 [#allocation5], 4
      %s50 = int_to_ptr.vmem [resolvable:$true] %s49
      %52 = dma.vmem_to_hbm [thread:$0]  %s50, 256, %s1, [#allocation4]
    $region13: #{tpu_custom_call.1} parent=1 // pred_fallthru
      _
    // Predicated region
    $region14: #{tpu_custom_call.1} parent=1 // pred_check
      _
    $region15: #{tpu_custom_call.1} parent=1 // pred_check_branch
      %54 = sbr.rel (0) target = $region17
    $region16: #{tpu_custom_call.1} parent=1 // pred_region
      %55 = dma.done [#allocation4], 256
    $region17: #{tpu_custom_call.1} parent=1 // pred_fallthru
      _
    %56 = vsyncpa [#allocation3], 1
    %57 = vsyncpa [#allocation4], 1

</llo_original>
